<compile_context>
chip_gen: v5e
topology: v5e:2x2
jax: 0.10.0
libtpu: 0.0.40
codegen_flags: <defaults>
</compile_context>

<pallas_src>
import jax
import jax.numpy as jnp
from jax.experimental import pallas as pl
from jax.experimental.pallas import tpu as pltpu


def _round_up(x: int, m: int) -> int:
    return ((x + m - 1) // m) * m


def _bmm_kernel(a_ref, b_ref, o_ref, acc_ref):
    # a_ref: (tm, tk), b_ref: (tk, tn), o_ref: (tm, tn)  (batch dim squeezed)
    k = pl.program_id(3)

    @pl.when(k == 0)
    def _():
        acc_ref[...] = jnp.zeros_like(acc_ref)

    acc_ref[...] += jnp.dot(
        a_ref[...], b_ref[...], preferred_element_type=jnp.float32
    )

    @pl.when(k == pl.num_programs(3) - 1)
    def _():
        o_ref[...] = acc_ref[...].astype(o_ref.dtype)


def batched_gemm(A, B, *, tm: int = 256, tn: int = 256, tk: int = 512):
    """Pallas TPU equivalent of torch.bmm(A, B).

    A: (B, M, K), B: (B, K, N) -> (B, M, N)
    """
    assert A.ndim == 3 and B.ndim == 3
    bA, M, K = A.shape
    bB, K2, N = B.shape
    assert bA == bB and K == K2, "incompatible shapes for bmm"

    out_dtype = jnp.result_type(A.dtype, B.dtype)

    # Shrink tiles for small problems while keeping TPU layout alignment:
    # tm multiple of 8 (f32 sublanes), tn/tk multiples of 128 (lanes).
    tm = min(tm, _round_up(M, 8))
    tn = min(tn, _round_up(N, 128))
    tk = min(tk, _round_up(K, 128))

    # Pad ragged dims up to tile multiples (zero K padding is exact).
    Mp, Np, Kp = _round_up(M, tm), _round_up(N, tn), _round_up(K, tk)
    if (Mp, Kp) != (M, K):
        A = jnp.pad(A, ((0, 0), (0, Mp - M), (0, Kp - K)))
    if (Kp, Np) != (K, N):
        B = jnp.pad(B, ((0, 0), (0, Kp - K), (0, Np - N)))

    grid = (bA, Mp // tm, Np // tn, Kp // tk)

    # VMEM budget: double-buffered input/output tiles + f32 accumulator.
    a_bytes = tm * tk * jnp.dtype(A.dtype).itemsize
    b_bytes = tk * tn * jnp.dtype(B.dtype).itemsize
    o_bytes = tm * tn * jnp.dtype(out_dtype).itemsize
    tile_bytes = 2 * (a_bytes + b_bytes + o_bytes) + tm * tn * 4
    vmem_limit = int(min(max(2 * tile_bytes, 32 * 1024 * 1024),
                         64 * 1024 * 1024))

    out = pl.pallas_call(
        _bmm_kernel,
        out_shape=jax.ShapeDtypeStruct((bA, Mp, Np), out_dtype),
        grid_spec=pltpu.PrefetchScalarGridSpec(
            num_scalar_prefetch=0,
            grid=grid,
            in_specs=[
                # batch dim squeezed (None) -> kernel sees clean 2-D tiles
                pl.BlockSpec((None, tm, tk), lambda b, i, j, k: (b, i, k)),
                pl.BlockSpec((None, tk, tn), lambda b, i, j, k: (b, k, j)),
            ],
            out_specs=pl.BlockSpec((None, tm, tn), lambda b, i, j, k: (b, i, j)),
            scratch_shapes=[pltpu.VMEM((tm, tn), jnp.float32)],
        ),
        compiler_params=pltpu.CompilerParams(
            dimension_semantics=("parallel", "parallel", "parallel", "arbitrary"),
            vmem_limit_bytes=vmem_limit,
        ),
    )(A, B)

    if (Mp, Np) != (M, N):
        out = out[:, :M, :N]
    return out


if __name__ == "__main__":
    key = jax.random.PRNGKey(0)
    k_a, k_b, k_c, k_d = jax.random.split(key, 4)

    # --- Small test (shapes consistent with torch.bmm usage): ragged dims ---
    batch, M, K, N = 2, 8, 32, 16
    A = jax.random.normal(k_a, (batch, M, K), dtype=jnp.float32)
    B = jax.random.normal(k_b, (batch, K, N), dtype=jnp.float32)

    out = jax.block_until_ready(batched_gemm(A, B))
    ref = jnp.einsum("bmk,bkn->bmn", A, B)
    assert out.shape == (batch, M, N)
    assert jnp.allclose(out, ref, atol=1e-5, rtol=1e-5)

    # --- Aligned test exercising the tiled (b,i,j,k) reduction path ---
    batch2, M2, K2, N2 = 2, 256, 512, 256
    A2 = jax.random.normal(k_c, (batch2, M2, K2), dtype=jnp.float32)
    B2 = jax.random.normal(k_d, (batch2, K2, N2), dtype=jnp.float32)

    out2 = jax.block_until_ready(batched_gemm(A2, B2, tm=128, tn=128, tk=256))
    ref2 = jnp.einsum("bmk,bkn->bmn", A2, B2)
    assert out2.shape == (batch2, M2, N2)
    assert jnp.allclose(out2, ref2, atol=1e-3, rtol=1e-3)

    print("KERNEL_OK")
</pallas_src>

<mosaic_0001>
module attributes {stable_mosaic.version = 11 : i64} {
  func.func @_bmm_kernel(%arg0: i32, %arg1: i32, %arg2: i32, %arg3: i32, %arg4: memref<1x8x128xf32, #tpu.memory_space<vmem>>, %arg5: memref<1x128x128xf32, #tpu.memory_space<vmem>>, %arg6: memref<1x8x128xf32, #tpu.memory_space<vmem>>, %arg7: memref<8x128xf32, #tpu.memory_space<vmem>>) attributes {dimension_semantics = [#tpu.dimension_semantics<parallel>, #tpu.dimension_semantics<parallel>, #tpu.dimension_semantics<parallel>, #tpu.dimension_semantics<arbitrary>], iteration_bounds = array<i64: 2, 1, 1, 1>, scalar_prefetch = 0 : i64, scratch_operands = 1 : i64, tpu.core_type = #tpu.core_type<tc>, window_params = [{transform_indices = @transform_0, window_bounds = array<i64: 1, 8, 128>}, {transform_indices = @transform_1, window_bounds = array<i64: 1, 128, 128>}, {transform_indices = @transform_2, window_bounds = array<i64: 1, 8, 128>}]} {
    %c0_i32 = arith.constant 0 : i32
    %0 = arith.cmpi eq, %arg3, %c0_i32 : i32
    %1 = arith.extui %0 : i1 to i32
    %c0_i32_0 = arith.constant 0 : i32
    %2 = arith.cmpi ne, %1, %c0_i32_0 : i32
    scf.if %2 {
      %cst_12 = arith.constant 0.000000e+00 : f32
      %14 = vector.broadcast %cst_12 : f32 to vector<8x128xf32>
      %c0_13 = arith.constant 0 : index
      %c0_14 = arith.constant 0 : index
      %15 = vector.load %arg7[%c0_13, %c0_14] : memref<8x128xf32, #tpu.memory_space<vmem>>, vector<8x128xf32>
      tpu.vector_store %arg7[%c0_13, %c0_14], %14 {strides = array<i32>} : memref<8x128xf32, #tpu.memory_space<vmem>>, vector<8x128xf32>,
    } else {
    }
    %c0 = arith.constant 0 : index
    %c0_1 = arith.constant 0 : index
    %3 = vector.load %arg7[%c0, %c0_1] : memref<8x128xf32, #tpu.memory_space<vmem>>, vector<8x128xf32>
    %c0_2 = arith.constant 0 : index
    %c0_3 = arith.constant 0 : index
    %c0_4 = arith.constant 0 : index
    %4 = vector.load %arg4[%c0_2, %c0_3, %c0_4] : memref<1x8x128xf32, #tpu.memory_space<vmem>>, vector<1x8x128xf32>
    %5 = vector.shape_cast %4 : vector<1x8x128xf32> to vector<8x128xf32>
    %c0_5 = arith.constant 0 : index
    %c0_6 = arith.constant 0 : index
    %c0_7 = arith.constant 0 : index
    %6 = vector.load %arg5[%c0_5, %c0_6, %c0_7] : memref<1x128x128xf32, #tpu.memory_space<vmem>>, vector<1x128x128xf32>
    %7 = vector.shape_cast %6 : vector<1x128x128xf32> to vector<128x128xf32>
    %cst = arith.constant dense<0.000000e+00> : vector<8x128xf32>
    %8 = tpu.matmul %5, %7, %cst {dimension_numbers = #tpu.dot_dimension_numbers<[1], [0], [0], [1], [0, 0, 1, 1], [], []>} : vector<8x128xf32>, vector<128x128xf32>, vector<8x128xf32> -> vector<8x128xf32>
    %9 = arith.addf %3, %8 : vector<8x128xf32>
    %c0_8 = arith.constant 0 : index
    %c0_9 = arith.constant 0 : index
    %10 = vector.load %arg7[%c0_8, %c0_9] : memref<8x128xf32, #tpu.memory_space<vmem>>, vector<8x128xf32>
    tpu.vector_store %arg7[%c0_8, %c0_9], %9 {strides = array<i32>} : memref<8x128xf32, #tpu.memory_space<vmem>>, vector<8x128xf32>,
    %c0_i32_10 = arith.constant 0 : i32
    %11 = arith.cmpi eq, %arg3, %c0_i32_10 : i32
    %12 = arith.extui %11 : i1 to i32
    %c0_i32_11 = arith.constant 0 : i32
    %13 = arith.cmpi ne, %12, %c0_i32_11 : i32
    scf.if %13 {
      %c0_12 = arith.constant 0 : index
      %c0_13 = arith.constant 0 : index
      %14 = vector.load %arg7[%c0_12, %c0_13] : memref<8x128xf32, #tpu.memory_space<vmem>>, vector<8x128xf32>
      %c0_14 = arith.constant 0 : index
      %c0_15 = arith.constant 0 : index
      %c0_16 = arith.constant 0 : index
      %15 = vector.load %arg6[%c0_14, %c0_15, %c0_16] : memref<1x8x128xf32, #tpu.memory_space<vmem>>, vector<1x8x128xf32>
      %16 = vector.shape_cast %15 : vector<1x8x128xf32> to vector<8x128xf32>
      %17 = vector.shape_cast %14 : vector<8x128xf32> to vector<1x8x128xf32>
      tpu.vector_store %arg6[%c0_14, %c0_15, %c0_16], %17 {strides = array<i32>} : memref<1x8x128xf32, #tpu.memory_space<vmem>>, vector<1x8x128xf32>,
    } else {
    }
    return
  }
  func.func @transform_0(%arg0: i32, %arg1: i32, %arg2: i32, %arg3: i32) -> (i32, i32, i32) {
    %c0_i32 = arith.constant 0 : i32
    return %arg0, %arg1, %arg3 : i32, i32, i32
  }
  func.func @transform_1(%arg0: i32, %arg1: i32, %arg2: i32, %arg3: i32) -> (i32, i32, i32) {
    %c0_i32 = arith.constant 0 : i32
    return %arg0, %arg3, %arg2 : i32, i32, i32
  }
  func.func @transform_2(%arg0: i32, %arg1: i32, %arg2: i32, %arg3: i32) -> (i32, i32, i32) {
    %c0_i32 = arith.constant 0 : i32
    return %arg0, %arg1, %arg2 : i32, i32, i32
  }
}

</mosaic_0001>

<llo_original>
// kernel: tpu_custom_call.1
$region0: #{tpu_custom_call.1}
  #allocation0 [shape = 'u32[]', space=smem, size = 0x4, offset = 0x4, fixed_abs, tag = 'smem constant byte address 0x4 - core index']
  #allocation1 [shape = 'u32[72,128]{1,0:T(1,128)}', space=vmem, size = 0x9000, scoped, tag = 'internal scratch']
  #allocation2 [shape = 'f32[8,128]{1,0:T(8,128)}', space=vmem, size = 0x1000, scoped, tag = 'scratch operand']
  %s0 = inlined_call_operand.hbm [shape: f32[2,8,128], index: 0, kind: input, shape index: {}]
  %s1 = inlined_call_operand.hbm [shape: f32[2,128,128], index: 1, kind: input, shape index: {}]
  %s2 = inlined_call_operand.hbm [shape: f32[2,8,128], index: 2, kind: output, shape index: {}]
  %s3 = sld [smem:[#allocation0]]
  $region57: #{tpu_custom_call.1} parent=0
    _
  %s5 = ssub.s32 1, %s3
  %s6 = scalar_select 0, %s5, %s3
  $region1: #{tpu_custom_call.1} parent=0
    #allocation3 [shape = 'u8[8192]{0}', space=vmem, size = 0x2000, scoped, tag = 'input window, operand 0']
    #allocation4 [shape = 's32[2]{0}', space=sflag, size = 0x8, scoped, tag = 'scoped memory for tpu_custom_call.1']
    #allocation5 [shape = 's32[2]{0}', space=sflag, size = 0x8, scoped, tag = 'scoped memory for tpu_custom_call.1']
    #allocation6 [shape = 'u8[131072]{0}', space=vmem, size = 0x20000, scoped, tag = 'input window, operand 1']
    #allocation7 [shape = 's32[2]{0}', space=sflag, size = 0x8, scoped, tag = 'scoped memory for tpu_custom_call.1']
    #allocation8 [shape = 'u8[8192]{0}', space=vmem, size = 0x2000, scoped, tag = 'output window, operand 0']
    %7 = vsyncpa [#allocation4], 0
    %s8 = scalar_lea.sflag [#allocation4], 1
    %9 = vsyncpa %s8, 0
    %10 = vsyncpa [#allocation7], 0
    %s11 = scalar_lea.sflag [#allocation7], 1
    %12 = vsyncpa %s11, 0
    %13 = vsyncpa [#allocation5], 0
    %s14 = scalar_lea.sflag [#allocation5], 1
    %15 = vsyncpa %s14, 0
    loop: start=0, step=1, limit=4
    $region2: #{tpu_custom_call.1} parent=1 // loop_pre_header
      _
    $region3: #{tpu_custom_call.1} parent=1 // loop_header
      %s17 = sphi 0, %s21
      %p18 = scmp.ge.s32.totalorder %s17, 4
      %s24 = sphi 0, %s50
      %s25 = sphi 0, %s46
      %s26 = sphi 0, %s42
      %s27 = sphi 0, %s38
      %s28 = sphi 0, %s24
      %s29 = sphi 0, %s25
      %s30 = sphi 0, %s26
      %s31 = sphi 0, %s27
      %s32 = sphi 0, %s28
      %s33 = sphi 0, %s29
      %s34 = sphi 0, %s30
      %s35 = sphi 0, %s31
      %s57 = sphi 0, %s59
      %s60 = sphi 0, %s57
      %s61 = sphi 0, %s60
      %s77 = sphi 0, %s61
      %s87 = sphi 0, %s89
      %s90 = sphi 0, %s87
      %s91 = sphi 0, %s90
      %s107 = sphi 0, %s91
      %s117 = sphi 0, %s119
      %s120 = sphi 0, %s117
      %s121 = sphi 0, %s120
      %s137 = sphi 0, %s121
    $region4: #{tpu_custom_call.1} parent=1 // loop_header_branch
      %20 = sbr.rel (%p18) target = $region8
    $region5: #{tpu_custom_call.1} parent=1 // loop_body
      %s22 = ssub.s32 %s17, 1
      %s23 = ssub.s32 %s17, 2
      %s36 = sadd.s32 1, %s27
      %p37 = scmp.ge.s32.totalorder %s36, 1
      %s38 = scalar_select %p37, 0, %s36
      %s39 = sadd.s32 1, %s26
      %s40 = scalar_select %p37, %s39, %s26
      %p41 = scmp.ge.s32.totalorder %s40, 1
      %s42 = scalar_select %p41, 0, %s40
      %s43 = sadd.s32 1, %s25
      %s44 = scalar_select %p41, %s43, %s25
      %p45 = scmp.ge.s32.totalorder %s44, 1
      %s46 = scalar_select %p45, 0, %s44
      %s47 = sadd.s32 1, %s24
      %s48 = scalar_select %p45, %s47, %s24
      %p49 = scmp.ge.s32.totalorder %s48, 2
      %s50 = scalar_select %p49, 0, %s48
      %s51 = ssub.s32 %s24, %s50
      %s52 = ssub.s32 %s25, %s46
      %s53 = sor.u32 %s51, %s52
      %s54 = ssub.s32 %s27, %s38
      %s55 = sor.u32 %s53, %s54
      %p56 = scmp.eq.s32.totalorder %s55, 0
      %s58 = sadd.s32 %s57, 1
      %s59 = scalar_select %p56, %s57, %s58
      %p62 = pneg %p56
      %p63 = scmp.eq.s32.totalorder %s17, 1
      %p64 = por %p62, %p63
      %p65 = scmp.ne.s32.totalorder %s57, %s60
      %p66 = scmp.eq.s32.totalorder %s17, 0
      %p67 = por %p65, %p66
      %p68 = scmp.ne.s32.totalorder %s57, %s60
      %p69 = scmp.eq.s32.totalorder %s22, 1
      %p70 = por %p68, %p69
      %p71 = scmp.ne.s32.totalorder %s60, %s61
      %p72 = scmp.eq.s32.totalorder %s22, 0
      %p73 = por %p71, %p72
      %p74 = scmp.ne.s32.totalorder %s60, %s61
      %p75 = scmp.eq.s32.totalorder %s23, 1
      %p76 = por %p74, %p75
      %p78 = scmp.ne.s32.totalorder %s61, %s77
      %p79 = scmp.eq.s32.totalorder %s23, 0
      %p80 = por %p78, %p79
      %s81 = ssub.s32 %s24, %s50
      %s82 = ssub.s32 %s27, %s38
      %s83 = sor.u32 %s81, %s82
      %s84 = ssub.s32 %s26, %s42
      %s85 = sor.u32 %s83, %s84
      %p86 = scmp.eq.s32.totalorder %s85, 0
      %s88 = sadd.s32 %s87, 1
      %s89 = scalar_select %p86, %s87, %s88
      %p92 = pneg %p86
      %p93 = scmp.eq.s32.totalorder %s17, 1
      %p94 = por %p92, %p93
      %p95 = scmp.ne.s32.totalorder %s87, %s90
      %p96 = scmp.eq.s32.totalorder %s17, 0
      %p97 = por %p95, %p96
      %p98 = scmp.ne.s32.totalorder %s87, %s90
      %p99 = scmp.eq.s32.totalorder %s22, 1
      %p100 = por %p98, %p99
      %p101 = scmp.ne.s32.totalorder %s90, %s91
      %p102 = scmp.eq.s32.totalorder %s22, 0
      %p103 = por %p101, %p102
      %p104 = scmp.ne.s32.totalorder %s90, %s91
      %p105 = scmp.eq.s32.totalorder %s23, 1
      %p106 = por %p104, %p105
      %p108 = scmp.ne.s32.totalorder %s91, %s107
      %p109 = scmp.eq.s32.totalorder %s23, 0
      %p110 = por %p108, %p109
      %s111 = ssub.s32 %s24, %s50
      %s112 = ssub.s32 %s25, %s46
      %s113 = sor.u32 %s111, %s112
      %s114 = ssub.s32 %s26, %s42
      %s115 = sor.u32 %s113, %s114
      %p116 = scmp.eq.s32.totalorder %s115, 0
      %s118 = sadd.s32 %s117, 1
      %s119 = scalar_select %p116, %s117, %s118
      %p122 = pneg %p116
      %p123 = scmp.eq.s32.totalorder %s17, 1
      %p124 = por %p122, %p123
      %p125 = scmp.ne.s32.totalorder %s117, %s120
      %p126 = scmp.eq.s32.totalorder %s17, 0
      %p127 = por %p125, %p126
      %p128 = scmp.ne.s32.totalorder %s117, %s120
      %p129 = scmp.eq.s32.totalorder %s22, 1
      %p130 = por %p128, %p129
      %p131 = scmp.ne.s32.totalorder %s120, %s121
      %p132 = scmp.eq.s32.totalorder %s22, 0
      %p133 = por %p131, %p132
      %p134 = scmp.ne.s32.totalorder %s120, %s121
      %p135 = scmp.eq.s32.totalorder %s23, 1
      %p136 = por %p134, %p135
      %p138 = scmp.ne.s32.totalorder %s121, %s137
      %p139 = scmp.eq.s32.totalorder %s23, 0
      %p140 = por %p138, %p139
      %p141 = scmp.le.s32.totalorder 1, %s17
      %p142 = scmp.lt.s32.totalorder %s17, 3
      %p143 = pnand %p141, %p142
      %p144 = pneg %p143
      // Predicated region
      $region9: #{tpu_custom_call.1} parent=5 // pred_check
        _
      $region10: #{tpu_custom_call.1} parent=5 // pred_check_branch
        %146 = sbr.rel (%p143) target = $region12
      $region11: #{tpu_custom_call.1} parent=5 // pred_region
        %s147 = ssub.s32 %s17, 1
      $region12: #{tpu_custom_call.1} parent=5 // pred_fallthru
        _
      %p148 = scmp.lt.s32.totalorder %s17, 2
      // Predicated region
      $region13: #{tpu_custom_call.1} parent=5 // pred_check
        %p149 = pneg %p148
      $region14: #{tpu_custom_call.1} parent=5 // pred_check_branch
        %151 = sbr.rel (%p149) target = $region16
      $region15: #{tpu_custom_call.1} parent=5 // pred_region
        // Predicated region
        $region17: #{tpu_custom_call.1} parent=15 // pred_check
          %p152 = pneg %p67
        $region18: #{tpu_custom_call.1} parent=15 // pred_check_branch
          %154 = sbr.rel (%p152) target = $region20
        $region19: #{tpu_custom_call.1} parent=15 // pred_region
          %s155 = sand.u32 %s57, 1
          %s156 = scalar_lea.sflag [#allocation4], %s155
          %s157 = sand.u32 %s57, 1
          %s158 = smul.addr %s157, 8
          %s159 = scalar_lea.vmem [#allocation3], %s158
          %161 = vsyncadd %s156, 0
          %s162 = sadd.s32 %s27, %s25
          %s163 = sadd.s32 %s162, %s24
          %s164 = smul.addr %s163, 8
          %s165 = scalar_lea.hbm %s0, %s164
          %s167 = sshll.u32 %s165, 4
          %s168 = int_to_ptr.hbm [resolvable:$true] %s167
          %s169 = sshll.u32 %s159, 4
          %s170 = int_to_ptr.vmem [resolvable:$true] %s169
          %172 = dma.hbm_to_vmem [thread:$0]  %s168, 128, %s170, %s156
        $region20: #{tpu_custom_call.1} parent=15 // pred_fallthru
          _
        // Predicated region
        $region21: #{tpu_custom_call.1} parent=15 // pred_check
          %p173 = pneg %p97
        $region22: #{tpu_custom_call.1} parent=15 // pred_check_branch
          %175 = sbr.rel (%p173) target = $region24
        $region23: #{tpu_custom_call.1} parent=15 // pred_region
          %s176 = sand.u32 %s87, 1
          %s177 = scalar_lea.sflag [#allocation7], %s176
          %s178 = sand.u32 %s87, 1
          %s179 = smul.addr %s178, 128
          %s180 = scalar_lea.vmem [#allocation6], %s179
          %s181 = smul.u32 16, %s27
          %183 = vsyncadd %s177, 0
          %s184 = sadd.s32 %s26, %s181
          %s185 = smul.addr %s24, 16
          %s186 = sadd.s32 %s184, %s185
          %s187 = smul.addr %s186, 8
          %s188 = scalar_lea.hbm %s1, %s187
          %s189 = sshll.u32 %s188, 4
          %s190 = int_to_ptr.hbm [resolvable:$true] %s189
          %s191 = sshll.u32 %s180, 4
          %s192 = int_to_ptr.vmem [resolvable:$true] %s191
          %197 = dma.hbm_to_vmem [thread:$0]  %s190, 2048, %s192, %s177, 128, 128, 8
        $region24: #{tpu_custom_call.1} parent=15 // pred_fallthru
          _
      $region16: #{tpu_custom_call.1} parent=5 // pred_fallthru
        _
      %p198 = scmp.le.s32.totalorder 1, %s17
      %p199 = scmp.lt.s32.totalorder %s17, 3
      %p200 = pnand %p198, %p199
      %p201 = pneg %p200
      // Predicated region
      $region25: #{tpu_custom_call.1} parent=5 // pred_check
        _
      $region26: #{tpu_custom_call.1} parent=5 // pred_check_branch
        %203 = sbr.rel (%p200) target = $region28
      $region27: #{tpu_custom_call.1} parent=5 // pred_region
        %s204 = ssub.s32 %s17, 1
        %s205 = sand.u32 %s60, 1
        %s206 = scalar_lea.sflag [#allocation4], %s205
        %s207 = sand.u32 %s60, 1
        %s208 = smul.addr %s207, 8
        %s209 = scalar_lea.vmem [#allocation3], %s208
        // Predicated region
        $region29: #{tpu_custom_call.1} parent=27 // pred_check
          %p210 = pneg %p73
        $region30: #{tpu_custom_call.1} parent=27 // pred_check_branch
          %212 = sbr.rel (%p210) target = $region32
        $region31: #{tpu_custom_call.1} parent=27 // pred_region
          %214 = dma.done %s206, 128
        $region32: #{tpu_custom_call.1} parent=27 // pred_fallthru
          _
        %s215 = sand.u32 %s90, 1
        %s216 = scalar_lea.sflag [#allocation7], %s215
        %s217 = sand.u32 %s90, 1
        %s218 = smul.addr %s217, 128
        %s219 = scalar_lea.vmem [#allocation6], %s218
        // Predicated region
        $region33: #{tpu_custom_call.1} parent=27 // pred_check
          %p220 = pneg %p103
        $region34: #{tpu_custom_call.1} parent=27 // pred_check_branch
          %222 = sbr.rel (%p220) target = $region36
        $region35: #{tpu_custom_call.1} parent=27 // pred_region
          %224 = dma.done %s216, 2048
        $region36: #{tpu_custom_call.1} parent=27 // pred_fallthru
          _
        %s225 = sand.u32 %s60, 1
        %s226 = scalar_lea.sflag [#allocation4], %s225
        %s227 = sand.u32 %s60, 1
        %s228 = smul.addr %s227, 8
        %s229 = scalar_lea.vmem [#allocation3], %s228
        %p230 = pneg %p73
        %p231 = pneg %p70
        %s232 = sand.u32 %s90, 1
        %s233 = scalar_lea.sflag [#allocation7], %s232
        %s234 = sand.u32 %s90, 1
        %s235 = smul.addr %s234, 128
        %s236 = scalar_lea.vmem [#allocation6], %s235
        %p237 = pneg %p103
        %p238 = pneg %p100
        %p239 = pneg %p133
        %p240 = pneg %p130
        %s241 = sand.u32 %s120, 1
        %s242 = scalar_lea.sflag [#allocation5], %s241
        %s243 = sand.u32 %s120, 1
        %s244 = smul.addr %s243, 8
        %s245 = scalar_lea.vmem [#allocation8], %s244
        %s246 = smul.u32 16, %s31
        %p247 = scmp.eq.s32.totalorder %s31, 0
        // Predicated region
        $region37: #{tpu_custom_call.1} parent=27 // pred_check
          %p248 = pneg %p247
        $region38: #{tpu_custom_call.1} parent=27 // pred_check_branch
          %250 = sbr.rel (%p248) target = $region40
        $region39: #{tpu_custom_call.1} parent=27 // pred_region
          %251 = vst [vmem:[#allocation2] sm:$0xff] 0.0
        $region40: #{tpu_custom_call.1} parent=27 // pred_fallthru
          _
        %v252 = vld [vmem:[#allocation2] sm:$0xff]
        %v253 = vld [vmem:[%s209] sm:$0xff]
        %v254 = vld [vmem:[%s219] sm:$0xff]
        %v255 = vld [vmem:[%s219 + $0x8] sm:$0xff]
        %v256 = vld [vmem:[%s219 + $0x10] sm:$0xff]
        %v257 = vld [vmem:[%s219 + $0x18] sm:$0xff]
        %v258 = vld [vmem:[%s219 + $0x20] sm:$0xff]
        %v259 = vld [vmem:[%s219 + $0x28] sm:$0xff]
        %v260 = vld [vmem:[%s219 + $0x30] sm:$0xff]
        %v261 = vld [vmem:[%s219 + $0x38] sm:$0xff]
        %v262 = vld [vmem:[%s219 + $0x40] sm:$0xff]
        %v263 = vld [vmem:[%s219 + $0x48] sm:$0xff]
        %v264 = vld [vmem:[%s219 + $0x50] sm:$0xff]
        %v265 = vld [vmem:[%s219 + $0x58] sm:$0xff]
        %v266 = vld [vmem:[%s219 + $0x60] sm:$0xff]
        %v267 = vld [vmem:[%s219 + $0x68] sm:$0xff]
        %v268 = vld [vmem:[%s219 + $0x70] sm:$0xff]
        %v269 = vld [vmem:[%s219 + $0x78] sm:$0xff]
        %270 = vmatpush.msra.mxu0 %v269
        %271 = vmatpush.msra.mxu0 %v268
        %272 = vmatpush.msra.mxu0 %v267
        %273 = vmatpush.msra.mxu0 %v266
        %274 = vmatpush.msra.mxu0 %v265
        %275 = vmatpush.msra.mxu0 %v264
        %276 = vmatpush.msra.mxu0 %v263
        %277 = vmatpush.msra.mxu0 %v262
        %278 = vmatpush.msra.mxu0 %v261
        %279 = vmatpush.msra.mxu0 %v260
        %280 = vmatpush.msra.mxu0 %v259
        %281 = vmatpush.msra.mxu0 %v258
        %282 = vmatpush.msra.mxu0 %v257
        %283 = vmatpush.msra.mxu0 %v256
        %284 = vmatpush.msra.mxu0 %v255
        %285 = vmatpush.msra.mxu0 %v254
        %286 = vmatmul.f32.gmra.mxu0 %v253
        %v287 = vpop.f32.mrf.mxu0
        %v288 = vadd.f32 0.0, %v287
        %289 = vdwg.mxu0
        %v290 = vadd.f32 %v252, %v288
        %291 = vst [vmem:[#allocation2] sm:$0xff] %v290
        // Predicated region
        $region41: #{tpu_custom_call.1} parent=27 // pred_check
          %p292 = pneg %p247
        $region42: #{tpu_custom_call.1} parent=27 // pred_check_branch
          %294 = sbr.rel (%p292) target = $region44
        $region43: #{tpu_custom_call.1} parent=27 // pred_region
          %v295 = vld [vmem:[#allocation2] sm:$0xff]
          %296 = vst [vmem:[%s245] sm:$0xff] %v295
        $region44: #{tpu_custom_call.1} parent=27 // pred_fallthru
          _
        %s297 = sand.u32 %s120, 1
        %s298 = scalar_lea.sflag [#allocation5], %s297
        %s299 = sand.u32 %s120, 1
        %s300 = smul.addr %s299, 8
        %s301 = scalar_lea.vmem [#allocation8], %s300
        // Predicated region
        $region45: #{tpu_custom_call.1} parent=27 // pred_check
          %p302 = pneg %p130
        $region46: #{tpu_custom_call.1} parent=27 // pred_check_branch
          %304 = sbr.rel (%p302) target = $region48
        $region47: #{tpu_custom_call.1} parent=27 // pred_region
          %306 = vsyncadd %s298, 0
          %s307 = sadd.s32 %s30, %s29
          %s308 = sadd.s32 %s307, %s28
          %s309 = smul.addr %s308, 8
          %s310 = scalar_lea.hbm %s2, %s309
          %s312 = sshll.u32 %s301, 4
          %s313 = int_to_ptr.vmem [resolvable:$true] %s312
          %s314 = sshll.u32 %s310, 4
          %s315 = int_to_ptr.hbm [resolvable:$true] %s314
          %317 = dma.vmem_to_hbm [thread:$0]  %s313, 128, %s315, %s298
        $region48: #{tpu_custom_call.1} parent=27 // pred_fallthru
          _
      $region28: #{tpu_custom_call.1} parent=5 // pred_fallthru
        _
      %p318 = scmp.le.s32.totalorder 2, %s17
      // Predicated region
      $region49: #{tpu_custom_call.1} parent=5 // pred_check
        %p319 = pneg %p318
      $region50: #{tpu_custom_call.1} parent=5 // pred_check_branch
        %321 = sbr.rel (%p319) target = $region52
      $region51: #{tpu_custom_call.1} parent=5 // pred_region
        %s322 = ssub.s32 %s17, 2
        // Predicated region
        $region53: #{tpu_custom_call.1} parent=51 // pred_check
          %p323 = pneg %p136
        $region54: #{tpu_custom_call.1} parent=51 // pred_check_branch
          %325 = sbr.rel (%p323) target = $region56
        $region55: #{tpu_custom_call.1} parent=51 // pred_region
          %s326 = sand.u32 %s121, 1
          %s327 = scalar_lea.sflag [#allocation5], %s326
          %s328 = sand.u32 %s121, 1
          %s329 = smul.addr %s328, 8
          %s330 = scalar_lea.vmem [#allocation8], %s329
          %332 = dma.done %s327, 128
        $region56: #{tpu_custom_call.1} parent=51 // pred_fallthru
          _
      $region52: #{tpu_custom_call.1} parent=5 // pred_fallthru
        _
    $region6: #{tpu_custom_call.1} parent=1 // loop_footer
      %s21 = sadd.s32 1, %s17
    $region7: #{tpu_custom_call.1} parent=1 // loop_footer_branch
      %16 = sbr.rel target = $region3
    $region8: #{tpu_custom_call.1} parent=1 // loop_exit
      _
    %333 = vsyncpa [#allocation4], 1
    %s334 = scalar_lea.sflag [#allocation4], 1
    %335 = vsyncpa %s334, 1
    %336 = vsyncpa [#allocation7], 1
    %s337 = scalar_lea.sflag [#allocation7], 1
    %338 = vsyncpa %s337, 1
    %339 = vsyncpa [#allocation5], 1
    %s340 = scalar_lea.sflag [#allocation5], 1
    %341 = vsyncpa %s340, 1

</llo_original>
